<compile_context>
chip_gen: v7x
topology: tpu7x:2x2x1
jax: 0.10.0
libtpu: 0.0.40
codegen_flags: <defaults>
</compile_context>

<pallas_src>
import jax
import jax.numpy as jnp
from jax.experimental import pallas as pl
from jax.experimental.pallas import tpu as pltpu

LANE = 128
MIN_TILE_B = 256  # don't split the batch into tiles smaller than this


def _round_up(x, m):
    return ((x + m - 1) // m) * m


def _cdiv(a, b):
    return (a + b - 1) // b


def explainer_kernel(obs_ref, w0_ref, b0_ref, w1_ref, b1_ref, w2_ref, b2_ref, out_ref):
    # obs_embed: Linear + tanh   (bf16 MXU operands, f32 accumulate / activations)
    h = jnp.dot(obs_ref[...], w0_ref[...], preferred_element_type=jnp.float32)
    h = jnp.tanh(h + b0_ref[...])

    # net: Linear + relu   (synthetic single-hidden-layer net)
    e = jnp.dot(h.astype(jnp.bfloat16), w1_ref[...], preferred_element_type=jnp.float32)
    e = jnp.maximum(e + b1_ref[...], 0.0)
    # final: first_act='relu' is a no-op here (max(max(x,0),0) == max(x,0)) -> elided.

    # final: Linear -> last_act=explain_fn (tanh). Lane-dense bf16 store (halves writeback).
    m = jnp.dot(e.astype(jnp.bfloat16), w2_ref[...], preferred_element_type=jnp.float32)
    out_ref[...] = jnp.tanh(m + b2_ref[...]).astype(out_ref.dtype)


def pad_params(params):
    """Pad weights/biases to lane-dense (multiple-of-128) feature dims. Call once per
    parameter set and reuse (hoisted out of the per-call path). Zero padding is exact
    for the real output columns (tanh(0)=0, relu(0)=0, zero rows/cols contribute 0)."""
    w0, b0, w1, b1, w2, b2 = params
    hidden = w0.shape[1]
    explain = w2.shape[1]
    hid_p = _round_up(hidden, LANE)
    exp_p = _round_up(explain, LANE)

    def padw(w, rows, cols):  # MXU operand -> bf16
        w = w.astype(jnp.bfloat16)
        return jnp.pad(w, ((0, rows - w.shape[0]), (0, cols - w.shape[1])))

    def padb(b, cols):  # bias stays f32
        b = b.astype(jnp.float32)
        return jnp.pad(b, ((0, 0), (0, cols - b.shape[1])))

    padded = (
        padw(w0, w0.shape[0], hid_p), padb(b0, hid_p),
        padw(w1, hid_p, hid_p),       padb(b1, hid_p),
        padw(w2, hid_p, exp_p),       padb(b2, exp_p),
    )
    return padded, explain


def _choose_batch_tiling(B, tile_b):
    """Pick (tile_rows, n_steps). Rows are 16-aligned (bf16 sublane pair). Guarantees
    >=2 grid steps when the batch is big enough (>= 2*MIN_TILE_B) so v7x's two
    TensorCores both get work; sizes the tile from the step count to avoid padding
    a whole extra tile for awkward batch sizes."""
    b16 = _round_up(B, 16)
    if b16 < 2 * MIN_TILE_B:
        return b16, 1
    n_steps = max(2, _cdiv(b16, tile_b))
    tile = _round_up(_cdiv(b16, n_steps), 16)
    n_steps = _cdiv(b16, tile)
    return tile, n_steps


def explainer_forward(obs, params, *, tile_b=512, padded=None):
    """Fused Explainer forward. Pads batch and feature dims internally; returns [B, explain] f32."""
    B, obs_size = obs.shape
    if padded is None:
        padded = pad_params(params)
    (w0p, b0p, w1p, b1p, w2p, b2p), explain = padded
    hid_p = w0p.shape[1]
    exp_p = w2p.shape[1]

    # ---- batch tiling / padding (single-pass cast + pad of obs) ----
    tile_rows, n_steps = _choose_batch_tiling(B, tile_b)
    B_pad = tile_rows * n_steps
    obs_p = jnp.pad(obs.astype(jnp.bfloat16), ((0, B_pad - B), (0, 0)))

    # ---- VMEM planning: single-buffer the constant-index weights at production sizes ----
    weight_bytes = (obs_size * hid_p + hid_p * hid_p + hid_p * exp_p) * 2  # bf16
    single_buffer_weights = weight_bytes > (8 << 20)
    wmode = pl.Buffered(1) if single_buffer_weights else None

    def full(shape):
        idx = lambda i: (0,) * len(shape)
        if wmode is not None:
            return pl.BlockSpec(shape, idx, pipeline_mode=wmode)
        return pl.BlockSpec(shape, idx)

    vmem_bytes = (
        weight_bytes * (1 if single_buffer_weights else 2)   # weights
        + 2 * 4 * (hid_p + hid_p + exp_p)                    # biases (f32, double-buffered)
        + 2 * tile_rows * obs_size * 2                       # obs tile (bf16, double-buffered)
        + 2 * tile_rows * exp_p * 2                          # out tile (bf16, double-buffered)
        + 2 * tile_rows * hid_p * 4                          # f32 activation intermediates
    )
    vmem_limit = min(max(int(vmem_bytes * 1.5), 32 << 20), 56 << 20)

    out_padded = pl.pallas_call(
        explainer_kernel,
        out_shape=jax.ShapeDtypeStruct((B_pad, exp_p), jnp.bfloat16),
        grid_spec=pltpu.PrefetchScalarGridSpec(
            num_scalar_prefetch=0,
            grid=(n_steps,),
            in_specs=[
                pl.BlockSpec((tile_rows, obs_size), lambda i: (i, 0)),  # obs tile (streamed)
                full((obs_size, hid_p)),   # w0
                full((1, hid_p)),          # b0
                full((hid_p, hid_p)),      # w1
                full((1, hid_p)),          # b1
                full((hid_p, exp_p)),      # w2
                full((1, exp_p)),          # b2
            ],
            out_specs=pl.BlockSpec((tile_rows, exp_p), lambda i: (i, 0)),  # lane-dense bf16 output
        ),
        compiler_params=pltpu.CompilerParams(
            dimension_semantics=("parallel",),
            vmem_limit_bytes=vmem_limit,
        ),
    )(obs_p, w0p, b0p, w1p, b1p, w2p, b2p)

    # Slice off batch/feature padding; upcast to f32 for the module's interface.
    return out_padded[:B, :explain].astype(jnp.float32)


def reference_forward_bf16(obs, params):
    """Matches kernel numerics: bf16 MXU operands, f32 accumulate/activations, bf16 output."""
    w0, b0, w1, b1, w2, b2 = params
    c = lambda x: x.astype(jnp.bfloat16)
    h = jnp.tanh(jnp.dot(c(obs), c(w0), preferred_element_type=jnp.float32) + b0)
    e = jnp.maximum(jnp.dot(c(h), c(w1), preferred_element_type=jnp.float32) + b1, 0.0)
    m = jnp.dot(c(e), c(w2), preferred_element_type=jnp.float32) + b2
    return jnp.tanh(m).astype(jnp.bfloat16).astype(jnp.float32)


def reference_forward_f32(obs, params):
    w0, b0, w1, b1, w2, b2 = params
    h = jnp.tanh(obs @ w0 + b0)
    e = jnp.maximum(h @ w1 + b1, 0.0)
    return jnp.tanh(e @ w2 + b2)


def init_params(key, obs_size, hidden, explain):
    # Deterministic xavier-ish init (stand-in for init_weights); biases zero.
    k0, k1, k2 = jax.random.split(key, 3)

    def xavier(k, shape):
        fan_in, fan_out = shape
        scale = jnp.sqrt(2.0 / (fan_in + fan_out))
        return (jax.random.normal(k, shape, jnp.float32) * scale).astype(jnp.float32)

    w0 = xavier(k0, (obs_size, hidden))
    b0 = jnp.zeros((1, hidden), jnp.float32)
    w1 = xavier(k1, (hidden, hidden))
    b1 = jnp.zeros((1, hidden), jnp.float32)
    w2 = xavier(k2, (hidden, explain))
    b2 = jnp.zeros((1, explain), jnp.float32)
    return (w0, b0, w1, b1, w2, b2)


if __name__ == "__main__":
    # Small demo shapes consistent with the module's vector path.
    B, OBS, HID, EXP = 64, 32, 32, 16

    key = jax.random.PRNGKey(0)
    k_obs, k_par = jax.random.split(key)
    obs = jax.random.normal(k_obs, (B, OBS), jnp.float32)
    params = init_params(k_par, OBS, HID, EXP)

    padded = pad_params(params)  # hoisted: pad weights/biases once, reuse across calls
    out = explainer_forward(obs, params, tile_b=512, padded=padded)
    out = jax.block_until_ready(out)

    assert out.shape == (B, EXP)

    ref_bf16 = reference_forward_bf16(obs, params)
    assert jnp.allclose(out, ref_bf16, atol=1e-2, rtol=1e-2), "mismatch vs bf16 reference"

    ref_f32 = reference_forward_f32(obs, params)
    assert jnp.allclose(out, ref_f32, atol=6e-2, rtol=6e-2), "mismatch vs f32 reference"

    print("KERNEL_OK")
</pallas_src>

<mosaic_0001>
module attributes {stable_mosaic.version = 11 : i64} {
  func.func @explainer_kernel(%arg0: i32, %arg1: memref<64x32xbf16, #tpu.memory_space<vmem>>, %arg2: memref<32x128xbf16, #tpu.memory_space<vmem>>, %arg3: memref<1x128xf32, #tpu.memory_space<vmem>>, %arg4: memref<128x128xbf16, #tpu.memory_space<vmem>>, %arg5: memref<1x128xf32, #tpu.memory_space<vmem>>, %arg6: memref<128x128xbf16, #tpu.memory_space<vmem>>, %arg7: memref<1x128xf32, #tpu.memory_space<vmem>>, %arg8: memref<64x128xbf16, #tpu.memory_space<vmem>>) attributes {dimension_semantics = [#tpu.dimension_semantics<parallel>], iteration_bounds = array<i64: 1>, scalar_prefetch = 0 : i64, scratch_operands = 0 : i64, tpu.core_type = #tpu.core_type<tc>, window_params = [{transform_indices = @transform_0, window_bounds = array<i64: 64, 32>}, {pipeline_mode = #tpu.pipeline_mode<synchronous>, transform_indices = @transform_1, window_bounds = array<i64: 32, 128>}, {pipeline_mode = #tpu.pipeline_mode<synchronous>, transform_indices = @transform_2, window_bounds = array<i64: 1, 128>}, {pipeline_mode = #tpu.pipeline_mode<synchronous>, transform_indices = @transform_3, window_bounds = array<i64: 128, 128>}, {pipeline_mode = #tpu.pipeline_mode<synchronous>, transform_indices = @transform_4, window_bounds = array<i64: 1, 128>}, {pipeline_mode = #tpu.pipeline_mode<synchronous>, transform_indices = @transform_5, window_bounds = array<i64: 128, 128>}, {pipeline_mode = #tpu.pipeline_mode<synchronous>, transform_indices = @transform_6, window_bounds = array<i64: 1, 128>}, {transform_indices = @transform_7, window_bounds = array<i64: 64, 128>}]} {
    %c0 = arith.constant 0 : index
    %c0_0 = arith.constant 0 : index
    %0 = vector.load %arg1[%c0, %c0_0] : memref<64x32xbf16, #tpu.memory_space<vmem>>, vector<64x32xbf16>
    %c0_1 = arith.constant 0 : index
    %c0_2 = arith.constant 0 : index
    %1 = vector.load %arg2[%c0_1, %c0_2] : memref<32x128xbf16, #tpu.memory_space<vmem>>, vector<32x128xbf16>
    %cst = arith.constant dense<0.000000e+00> : vector<64x128xf32>
    %2 = tpu.matmul %0, %1, %cst {dimension_numbers = #tpu.dot_dimension_numbers<[1], [0], [0], [1], [0, 0, 1, 1], [], []>} : vector<64x32xbf16>, vector<32x128xbf16>, vector<64x128xf32> -> vector<64x128xf32>
    %c0_3 = arith.constant 0 : index
    %c0_4 = arith.constant 0 : index
    %3 = vector.load %arg3[%c0_3, %c0_4] : memref<1x128xf32, #tpu.memory_space<vmem>>, vector<1x128xf32>
    %4 = vector.broadcast %3 : vector<1x128xf32> to vector<64x128xf32>
    %5 = arith.addf %2, %4 : vector<64x128xf32>
    %6 = math.tanh %5 : vector<64x128xf32>
    %7 = arith.truncf %6 : vector<64x128xf32> to vector<64x128xbf16>
    %c0_5 = arith.constant 0 : index
    %c0_6 = arith.constant 0 : index
    %8 = vector.load %arg4[%c0_5, %c0_6] : memref<128x128xbf16, #tpu.memory_space<vmem>>, vector<128x128xbf16>
    %cst_7 = arith.constant dense<0.000000e+00> : vector<64x128xf32>
    %9 = tpu.matmul %7, %8, %cst_7 {dimension_numbers = #tpu.dot_dimension_numbers<[1], [0], [0], [1], [0, 0, 1, 1], [], []>} : vector<64x128xbf16>, vector<128x128xbf16>, vector<64x128xf32> -> vector<64x128xf32>
    %c0_8 = arith.constant 0 : index
    %c0_9 = arith.constant 0 : index
    %10 = vector.load %arg5[%c0_8, %c0_9] : memref<1x128xf32, #tpu.memory_space<vmem>>, vector<1x128xf32>
    %11 = vector.broadcast %10 : vector<1x128xf32> to vector<64x128xf32>
    %12 = arith.addf %9, %11 : vector<64x128xf32>
    %cst_10 = arith.constant 0.000000e+00 : f32
    %13 = vector.broadcast %cst_10 : f32 to vector<64x128xf32>
    %14 = arith.maximumf %12, %13 : vector<64x128xf32>
    %15 = arith.truncf %14 : vector<64x128xf32> to vector<64x128xbf16>
    %c0_11 = arith.constant 0 : index
    %c0_12 = arith.constant 0 : index
    %16 = vector.load %arg6[%c0_11, %c0_12] : memref<128x128xbf16, #tpu.memory_space<vmem>>, vector<128x128xbf16>
    %cst_13 = arith.constant dense<0.000000e+00> : vector<64x128xf32>
    %17 = tpu.matmul %15, %16, %cst_13 {dimension_numbers = #tpu.dot_dimension_numbers<[1], [0], [0], [1], [0, 0, 1, 1], [], []>} : vector<64x128xbf16>, vector<128x128xbf16>, vector<64x128xf32> -> vector<64x128xf32>
    %c0_14 = arith.constant 0 : index
    %c0_15 = arith.constant 0 : index
    %18 = vector.load %arg7[%c0_14, %c0_15] : memref<1x128xf32, #tpu.memory_space<vmem>>, vector<1x128xf32>
    %19 = vector.broadcast %18 : vector<1x128xf32> to vector<64x128xf32>
    %20 = arith.addf %17, %19 : vector<64x128xf32>
    %21 = math.tanh %20 : vector<64x128xf32>
    %22 = arith.truncf %21 : vector<64x128xf32> to vector<64x128xbf16>
    %c0_16 = arith.constant 0 : index
    %c0_17 = arith.constant 0 : index
    %23 = vector.load %arg8[%c0_16, %c0_17] : memref<64x128xbf16, #tpu.memory_space<vmem>>, vector<64x128xbf16>
    tpu.vector_store %arg8[%c0_16, %c0_17], %22 {strides = array<i32>} : memref<64x128xbf16, #tpu.memory_space<vmem>>, vector<64x128xbf16>,
    return
  }
  func.func @transform_0(%arg0: i32) -> (i32, i32) {
    %c0_i32 = arith.constant 0 : i32
    %c0_i32_0 = arith.constant 0 : i32
    return %arg0, %c0_i32 : i32, i32
  }
  func.func @transform_1(%arg0: i32) -> (i32, i32) {
    %c0_i32 = arith.constant 0 : i32
    %c0_i32_0 = arith.constant 0 : i32
    %c0_i32_1 = arith.constant 0 : i32
    return %c0_i32, %c0_i32_0 : i32, i32
  }
  func.func @transform_2(%arg0: i32) -> (i32, i32) {
    %c0_i32 = arith.constant 0 : i32
    %c0_i32_0 = arith.constant 0 : i32
    %c0_i32_1 = arith.constant 0 : i32
    return %c0_i32, %c0_i32_0 : i32, i32
  }
  func.func @transform_3(%arg0: i32) -> (i32, i32) {
    %c0_i32 = arith.constant 0 : i32
    %c0_i32_0 = arith.constant 0 : i32
    %c0_i32_1 = arith.constant 0 : i32
    return %c0_i32, %c0_i32_0 : i32, i32
  }
  func.func @transform_4(%arg0: i32) -> (i32, i32) {
    %c0_i32 = arith.constant 0 : i32
    %c0_i32_0 = arith.constant 0 : i32
    %c0_i32_1 = arith.constant 0 : i32
    return %c0_i32, %c0_i32_0 : i32, i32
  }
  func.func @transform_5(%arg0: i32) -> (i32, i32) {
    %c0_i32 = arith.constant 0 : i32
    %c0_i32_0 = arith.constant 0 : i32
    %c0_i32_1 = arith.constant 0 : i32
    return %c0_i32, %c0_i32_0 : i32, i32
  }
  func.func @transform_6(%arg0: i32) -> (i32, i32) {
    %c0_i32 = arith.constant 0 : i32
    %c0_i32_0 = arith.constant 0 : i32
    %c0_i32_1 = arith.constant 0 : i32
    return %c0_i32, %c0_i32_0 : i32, i32
  }
  func.func @transform_7(%arg0: i32) -> (i32, i32) {
    %c0_i32 = arith.constant 0 : i32
    %c0_i32_0 = arith.constant 0 : i32
    return %arg0, %c0_i32 : i32, i32
  }
}

</mosaic_0001>

<llo_original>
// kernel: tpu_custom_call.1
$region0: #{tpu_custom_call.1}
  #allocation0 [shape = 'u32[]', space=smem, size = 0x4, offset = 0x4, fixed_abs, tag = 'smem constant byte address 0x4 - core index']
  #allocation1 [shape = 'u32[144,128]{1,0:T(1,128)}', space=vmem, size = 0x12000, scoped, tag = 'internal scratch']
  %s0 = inlined_call_operand.vmem [shape: bf16[64,32], index: 0, kind: input, shape index: {}]
  %s1 = inlined_call_operand.hbm [shape: bf16[32,128], index: 1, kind: input, shape index: {}]
  %s2 = inlined_call_operand.vmem [shape: f32[1,128], index: 2, kind: input, shape index: {}]
  %s3 = inlined_call_operand.hbm [shape: bf16[128,128], index: 3, kind: input, shape index: {}]
  %s4 = inlined_call_operand.vmem [shape: f32[1,128], index: 4, kind: input, shape index: {}]
  %s5 = inlined_call_operand.vmem [shape: bf16[128,128], index: 5, kind: input, shape index: {}]
  %s6 = inlined_call_operand.vmem [shape: f32[1,128], index: 6, kind: input, shape index: {}]
  %s7 = inlined_call_operand.hbm [shape: bf16[64,128], index: 7, kind: output, shape index: {}]
  %s8 = sld [smem:[#allocation0]]
  $region46: #{tpu_custom_call.1} parent=0
    _
  %s10 = ssub.s32 1, %s8
  %s11 = scalar_select 0, %s10, %s8
  $region1: #{tpu_custom_call.1} parent=0
    #allocation2 [shape = 'u8[8192]{0}', space=vmem, size = 0x2000, scoped, tag = 'input window, operand 1, single buffered']
    #allocation3 [shape = 's32[1]{0}', space=sflag, size = 0x4, scoped, tag = 'scoped memory for tpu_custom_call.1']
    #allocation4 [shape = 's32[1]{0}', space=sflag, size = 0x4, scoped, tag = 'scoped memory for tpu_custom_call.1']
    #allocation5 [shape = 'u8[32768]{0}', space=vmem, size = 0x8000, scoped, tag = 'input window, operand 3, single buffered']
    #allocation6 [shape = 's32[1]{0}', space=sflag, size = 0x4, scoped, tag = 'scoped memory for tpu_custom_call.1']
    #allocation7 [shape = 'u8[16384]{0}', space=vmem, size = 0x4000, scoped, tag = 'output window, operand 0, single buffered']
    %12 = vsyncpa [#allocation3], 0
    %13 = vsyncpa [#allocation6], 0
    %14 = vsyncpa [#allocation4], 0
    // Predicated region
    $region2: #{tpu_custom_call.1} parent=1 // pred_check
      _
    $region3: #{tpu_custom_call.1} parent=1 // pred_check_branch
      %16 = sbr.rel (0) target = $region5
    $region4: #{tpu_custom_call.1} parent=1 // pred_region
      _
    $region5: #{tpu_custom_call.1} parent=1 // pred_fallthru
      _
    // Predicated region
    $region6: #{tpu_custom_call.1} parent=1 // pred_check
      _
    $region7: #{tpu_custom_call.1} parent=1 // pred_check_branch
      %18 = sbr.rel (0) target = $region9
    $region8: #{tpu_custom_call.1} parent=1 // pred_region
      %s20 = ssub.s32 256, 256
      %21 = vsyncadd [#allocation3], %s20
      %s22 = sshll.u32 [#allocation2], 4
      %s23 = int_to_ptr.vmem [resolvable:$true] %s22
      %28 = dma.hbm_to_vmem [thread:$0]  %s1, 256, %s23, [#allocation3], 64, 64, 4
    $region9: #{tpu_custom_call.1} parent=1 // pred_fallthru
      _
    // Predicated region
    $region10: #{tpu_custom_call.1} parent=1 // pred_check
      _
    $region11: #{tpu_custom_call.1} parent=1 // pred_check_branch
      %30 = sbr.rel (0) target = $region13
    $region12: #{tpu_custom_call.1} parent=1 // pred_region
      _
    $region13: #{tpu_custom_call.1} parent=1 // pred_fallthru
      _
    // Predicated region
    $region14: #{tpu_custom_call.1} parent=1 // pred_check
      _
    $region15: #{tpu_custom_call.1} parent=1 // pred_check_branch
      %32 = sbr.rel (0) target = $region17
    $region16: #{tpu_custom_call.1} parent=1 // pred_region
      %s34 = ssub.s32 1024, 1024
      %35 = vsyncadd [#allocation6], %s34
      %s36 = sshll.u32 [#allocation5], 4
      %s37 = int_to_ptr.vmem [resolvable:$true] %s36
      %42 = dma.hbm_to_vmem [thread:$0]  %s3, 1024, %s37, [#allocation6], 64, 64, 4
    $region17: #{tpu_custom_call.1} parent=1 // pred_fallthru
      _
    // Predicated region
    $region18: #{tpu_custom_call.1} parent=1 // pred_check
      _
    $region19: #{tpu_custom_call.1} parent=1 // pred_check_branch
      %44 = sbr.rel (0) target = $region21
    $region20: #{tpu_custom_call.1} parent=1 // pred_region
      _
    $region21: #{tpu_custom_call.1} parent=1 // pred_fallthru
      _
    // Predicated region
    $region22: #{tpu_custom_call.1} parent=1 // pred_check
      _
    $region23: #{tpu_custom_call.1} parent=1 // pred_check_branch
      %46 = sbr.rel (0) target = $region25
    $region24: #{tpu_custom_call.1} parent=1 // pred_region
      _
    $region25: #{tpu_custom_call.1} parent=1 // pred_fallthru
      _
    // Predicated region
    $region26: #{tpu_custom_call.1} parent=1 // pred_check
      _
    $region27: #{tpu_custom_call.1} parent=1 // pred_check_branch
      %48 = sbr.rel (0) target = $region29
    $region28: #{tpu_custom_call.1} parent=1 // pred_region
      _
    $region29: #{tpu_custom_call.1} parent=1 // pred_fallthru
      _
    // Predicated region
    $region30: #{tpu_custom_call.1} parent=1 // pred_check
      _
    $region31: #{tpu_custom_call.1} parent=1 // pred_check_branch
      %50 = sbr.rel (0) target = $region33
    $region32: #{tpu_custom_call.1} parent=1 // pred_region
      %51 = dma.done [#allocation3], 256
    $region33: #{tpu_custom_call.1} parent=1 // pred_fallthru
      _
    // Predicated region
    $region34: #{tpu_custom_call.1} parent=1 // pred_check
      _
    $region35: #{tpu_custom_call.1} parent=1 // pred_check_branch
      %53 = sbr.rel (0) target = $region37
    $region36: #{tpu_custom_call.1} parent=1 // pred_region
      %54 = dma.done [#allocation6], 1024
    $region37: #{tpu_custom_call.1} parent=1 // pred_fallthru
      _
    %v56 = vld [vmem:[%s0] sm:$0xf]
    %v57 = vld [vmem:[%s0 + $0x4] sm:$0xf]
    %v58 = vld [vmem:[%s0 + $0x8] sm:$0xf]
    %v59 = vld [vmem:[%s0 + $0xc] sm:$0xf]
    %v60 = vld [vmem:[%s0 + $0x10] sm:$0xf]
    %v61 = vld [vmem:[%s0 + $0x14] sm:$0xf]
    %v62 = vld [vmem:[%s0 + $0x18] sm:$0xf]
    %v63 = vld [vmem:[%s0 + $0x1c] sm:$0xf]
    %v64 = vld [vmem:[#allocation2] sm:$0xf]
    %v65 = vld [vmem:[#allocation2 + $0x4] sm:$0xf]
    %v66 = vld [vmem:[#allocation2 + $0x8] sm:$0xf]
    %v67 = vld [vmem:[#allocation2 + $0xc] sm:$0xf]
    %v68 = vld [vmem:[%s2] sm:$0x1]
    %v70 = vlaneseq
    %v71 = vshrl.u32 %v70, 7
    %v72 = vsub.s32 0, %v71
    %v73 = vrot.slane %v68, %v72
    %v83 = vunpack.c.l.b16 %v56
    %v84 = vunpack.c.l.b16 %v57
    %v85 = vunpack.c.l.b16 %v58
    %v86 = vunpack.c.l.b16 %v59
    %v87 = vunpack.c.l.b16 %v60
    %v88 = vunpack.c.l.b16 %v61
    %v89 = vunpack.c.l.b16 %v62
    %v90 = vunpack.c.l.b16 %v63
    %v91 = vpack.c.b16 %v84, %v83
    %v92 = vpack.c.b16 %v86, %v85
    %v93 = vpack.c.b16 %v88, %v87
    %v94 = vpack.c.b16 %v90, %v89
    %v99 = vunpack.c.l.b16 %v64
    %v100 = vunpack.c.l.b16 %v65
    %v101 = vunpack.c.l.b16 %v66
    %v102 = vunpack.c.l.b16 %v67
    %v103 = vpack.c.b16 %v100, %v99
    %v104 = vpack.c.b16 %v102, %v101
    %vm107 = vcmask 261120
    %v109 = vsel %vm107, %v91, 0
    %v112 = vsel %vm107, %v92, 0
    %v115 = vsel %vm107, %v93, 0
    %v118 = vsel %vm107, %v94, 0
    %120 = vmatprep.subr.bf16.mxu0 0
    %121 = vmatpush1.bf16.msra.mxu0 %v103
    %122 = vmatprep.subr.bf16.mxu0 0
    %123 = vmatpush1.bf16.msra.mxu0 %v104
    %124 = vmatprep.subr.bf16.mxu0 0
    %125 = vmatpush1.bf16.msra.mxu0 0
    %126 = vmatprep.subr.bf16.mxu0 0
    %127 = vmatpush1.bf16.msra.mxu0 0
    %128 = vmatprep.subr.bf16.mxu0 0
    %129 = vmatpush1.bf16.msra.mxu0 0
    %130 = vmatprep.subr.bf16.mxu0 0
    %131 = vmatpush1.bf16.msra.mxu0 0
    %132 = vmatprep.subr.bf16.mxu0 0
    %133 = vmatpush1.bf16.msra.mxu0 0
    %134 = vmatprep.subr.bf16.mxu0 0
    %135 = vmatpush1.bf16.msra.mxu0 0
    %136 = vmatprep.subr.bf16.mxu0 0
    %137 = vmatpush1.bf16.msra.mxu0 0
    %138 = vmatprep.subr.bf16.mxu0 0
    %139 = vmatpush1.bf16.msra.mxu0 0
    %140 = vmatprep.subr.bf16.mxu0 0
    %141 = vmatpush1.bf16.msra.mxu0 0
    %142 = vmatprep.subr.bf16.mxu0 0
    %143 = vmatpush1.bf16.msra.mxu0 0
    %144 = vmatprep.subr.bf16.mxu0 0
    %145 = vmatpush1.bf16.msra.mxu0 0
    %146 = vmatprep.subr.bf16.mxu0 0
    %147 = vmatpush1.bf16.msra.mxu0 0
    %148 = vmatprep.subr.bf16.mxu0 0
    %149 = vmatpush1.bf16.msra.mxu0 0
    %150 = vmatprep.subr.bf16.mxu0 0
    %151 = vmatpush1.bf16.msra.mxu0 0
    %152 = vmatprep.mubr.bf16.mxu0 0
    %153 = vmatmul.mubr.bf16.gmra.mrb[0].mxu0 %v109
    %v154 = vpop.f32.mrb[0].mxu0
    %v155 = vadd.f32 %v73, %v154
    %v156 = vpop.f32.mrb[0].mxu0
    %v157 = vpop.f32.mrb[0].mxu0
    %v158 = vadd.f32 %v73, %v157
    %v159 = vpop.f32.mrb[0].mxu0
    %160 = vmatprep.mubr.bf16.mxu0 0
    %161 = vmatmul.mubr.bf16.gmra.mrb[0].mxu0 %v112
    %v162 = vpop.f32.mrb[0].mxu0
    %v163 = vadd.f32 %v73, %v162
    %v164 = vpop.f32.mrb[0].mxu0
    %v165 = vpop.f32.mrb[0].mxu0
    %v166 = vadd.f32 %v73, %v165
    %v167 = vpop.f32.mrb[0].mxu0
    %168 = vmatprep.mubr.bf16.mxu0 0
    %169 = vmatmul.mubr.bf16.gmra.mrb[0].mxu0 %v115
    %v170 = vpop.f32.mrb[0].mxu0
    %v171 = vadd.f32 %v73, %v170
    %v172 = vpop.f32.mrb[0].mxu0
    %v173 = vpop.f32.mrb[0].mxu0
    %v174 = vadd.f32 %v73, %v173
    %v175 = vpop.f32.mrb[0].mxu0
    %176 = vmatprep.mubr.bf16.mxu0 0
    %177 = vmatmul.mubr.bf16.gmra.mrb[0].mxu0 %v118
    %v178 = vpop.f32.mrb[0].mxu0
    %v179 = vadd.f32 %v73, %v178
    %v180 = vpop.f32.mrb[0].mxu0
    %v181 = vpop.f32.mrb[0].mxu0
    %v182 = vadd.f32 %v73, %v181
    %v183 = vpop.f32.mrb[0].mxu0
    %184 = vdwg.mxu0
    %v185 = vtanh.pop %v155
    %v186 = vtanh.pop %v158
    %v187 = vtanh.pop %v163
    %v188 = vtanh.pop %v166
    %v189 = vtanh.pop %v171
    %v190 = vtanh.pop %v174
    %v191 = vtanh.pop %v179
    %v192 = vtanh.pop %v182
    %v193 = vpack.c.bf16 %v186, %v185
    %v194 = vpack.c.bf16 %v188, %v187
    %v195 = vpack.c.bf16 %v190, %v189
    %v196 = vpack.c.bf16 %v192, %v191
    %v197 = vld [vmem:[#allocation5] sm:$0xf]
    %v198 = vld [vmem:[#allocation5 + $0x4] sm:$0xf]
    %v199 = vld [vmem:[#allocation5 + $0x8] sm:$0xf]
    %v200 = vld [vmem:[#allocation5 + $0xc] sm:$0xf]
    %v201 = vld [vmem:[#allocation5 + $0x10] sm:$0xf]
    %v202 = vld [vmem:[#allocation5 + $0x14] sm:$0xf]
    %v203 = vld [vmem:[#allocation5 + $0x18] sm:$0xf]
    %v204 = vld [vmem:[#allocation5 + $0x1c] sm:$0xf]
    %v205 = vld [vmem:[#allocation5 + $0x20] sm:$0xf]
    %v206 = vld [vmem:[#allocation5 + $0x24] sm:$0xf]
    %v207 = vld [vmem:[#allocation5 + $0x28] sm:$0xf]
    %v208 = vld [vmem:[#allocation5 + $0x2c] sm:$0xf]
    %v209 = vld [vmem:[#allocation5 + $0x30] sm:$0xf]
    %v210 = vld [vmem:[#allocation5 + $0x34] sm:$0xf]
    %v211 = vld [vmem:[#allocation5 + $0x38] sm:$0xf]
    %v212 = vld [vmem:[#allocation5 + $0x3c] sm:$0xf]
    %v213 = vld [vmem:[%s4] sm:$0x1]
    %v215 = vlaneseq
    %v216 = vshrl.u32 %v215, 7
    %v217 = vsub.s32 0, %v216
    %v218 = vrot.slane %v213, %v217
    %v236 = vunpack.c.l.b16 %v197
    %v237 = vunpack.c.l.b16 %v198
    %v238 = vunpack.c.l.b16 %v199
    %v239 = vunpack.c.l.b16 %v200
    %v240 = vunpack.c.l.b16 %v201
    %v241 = vunpack.c.l.b16 %v202
    %v242 = vunpack.c.l.b16 %v203
    %v243 = vunpack.c.l.b16 %v204
    %v244 = vunpack.c.l.b16 %v205
    %v245 = vunpack.c.l.b16 %v206
    %v246 = vunpack.c.l.b16 %v207
    %v247 = vunpack.c.l.b16 %v208
    %v248 = vunpack.c.l.b16 %v209
    %v249 = vunpack.c.l.b16 %v210
    %v250 = vunpack.c.l.b16 %v211
    %v251 = vunpack.c.l.b16 %v212
    %v252 = vpack.c.b16 %v237, %v236
    %v253 = vpack.c.b16 %v239, %v238
    %v254 = vpack.c.b16 %v241, %v240
    %v255 = vpack.c.b16 %v243, %v242
    %v256 = vpack.c.b16 %v245, %v244
    %v257 = vpack.c.b16 %v247, %v246
    %v258 = vpack.c.b16 %v249, %v248
    %v259 = vpack.c.b16 %v251, %v250
    %268 = vmatprep.subr.bf16.mxu0 0
    %269 = vmatpush1.bf16.msra.mxu0 %v252
    %270 = vmatprep.subr.bf16.mxu0 0
    %271 = vmatpush1.bf16.msra.mxu0 %v253
    %272 = vmatprep.subr.bf16.mxu0 0
    %273 = vmatpush1.bf16.msra.mxu0 %v254
    %274 = vmatprep.subr.bf16.mxu0 0
    %275 = vmatpush1.bf16.msra.mxu0 %v255
    %276 = vmatprep.subr.bf16.mxu0 0
    %277 = vmatpush1.bf16.msra.mxu0 %v256
    %278 = vmatprep.subr.bf16.mxu0 0
    %279 = vmatpush1.bf16.msra.mxu0 %v257
    %280 = vmatprep.subr.bf16.mxu0 0
    %281 = vmatpush1.bf16.msra.mxu0 %v258
    %282 = vmatprep.subr.bf16.mxu0 0
    %283 = vmatpush1.bf16.msra.mxu0 %v259
    %284 = vmatprep.subr.bf16.mxu0 0
    %285 = vmatpush1.bf16.msra.mxu0 0
    %286 = vmatprep.subr.bf16.mxu0 0
    %287 = vmatpush1.bf16.msra.mxu0 0
    %288 = vmatprep.subr.bf16.mxu0 0
    %289 = vmatpush1.bf16.msra.mxu0 0
    %290 = vmatprep.subr.bf16.mxu0 0
    %291 = vmatpush1.bf16.msra.mxu0 0
    %292 = vmatprep.subr.bf16.mxu0 0
    %293 = vmatpush1.bf16.msra.mxu0 0
    %294 = vmatprep.subr.bf16.mxu0 0
    %295 = vmatpush1.bf16.msra.mxu0 0
    %296 = vmatprep.subr.bf16.mxu0 0
    %297 = vmatpush1.bf16.msra.mxu0 0
    %298 = vmatprep.subr.bf16.mxu0 0
    %299 = vmatpush1.bf16.msra.mxu0 0
    %300 = vmatprep.mubr.bf16.mxu0 0
    %301 = vmatmul.mubr.bf16.gmra.mrb[0].mxu0 %v193
    %v302 = vpop.f32.mrb[0].mxu0
    %v303 = vadd.f32 %v218, %v302
    %v304 = vpop.f32.mrb[0].mxu0
    %v305 = vpop.f32.mrb[0].mxu0
    %v306 = vadd.f32 %v218, %v305
    %v307 = vpop.f32.mrb[0].mxu0
    %308 = vmatprep.mubr.bf16.mxu0 0
    %309 = vmatmul.mubr.bf16.gmra.mrb[0].mxu0 %v194
    %v310 = vpop.f32.mrb[0].mxu0
    %v311 = vadd.f32 %v218, %v310
    %v312 = vpop.f32.mrb[0].mxu0
    %v313 = vpop.f32.mrb[0].mxu0
    %v314 = vadd.f32 %v218, %v313
    %v315 = vpop.f32.mrb[0].mxu0
    %316 = vmatprep.mubr.bf16.mxu0 0
    %317 = vmatmul.mubr.bf16.gmra.mrb[0].mxu0 %v195
    %v318 = vpop.f32.mrb[0].mxu0
    %v319 = vadd.f32 %v218, %v318
    %v320 = vpop.f32.mrb[0].mxu0
    %v321 = vpop.f32.mrb[0].mxu0
    %v322 = vadd.f32 %v218, %v321
    %v323 = vpop.f32.mrb[0].mxu0
    %324 = vmatprep.mubr.bf16.mxu0 0
    %325 = vmatmul.mubr.bf16.gmra.mrb[0].mxu0 %v196
    %v326 = vpop.f32.mrb[0].mxu0
    %v327 = vadd.f32 %v218, %v326
    %v328 = vpop.f32.mrb[0].mxu0
    %v329 = vpop.f32.mrb[0].mxu0
    %v330 = vadd.f32 %v218, %v329
    %v331 = vpop.f32.mrb[0].mxu0
    %332 = vdwg.mxu0
    %v333 = vmax.f32 %v303, 0.0
    %v334 = vmax.f32 %v306, 0.0
    %v335 = vmax.f32 %v311, 0.0
    %v336 = vmax.f32 %v314, 0.0
    %v337 = vmax.f32 %v319, 0.0
    %v338 = vmax.f32 %v322, 0.0
    %v339 = vmax.f32 %v327, 0.0
    %v340 = vmax.f32 %v330, 0.0
    %v341 = vpack.c.bf16 %v334, %v333
    %v342 = vpack.c.bf16 %v336, %v335
    %v343 = vpack.c.bf16 %v338, %v337
    %v344 = vpack.c.bf16 %v340, %v339
    %v345 = vld [vmem:[%s5] sm:$0xf]
    %v346 = vld [vmem:[%s5 + $0x4] sm:$0xf]
    %v347 = vld [vmem:[%s5 + $0x8] sm:$0xf]
    %v348 = vld [vmem:[%s5 + $0xc] sm:$0xf]
    %v349 = vld [vmem:[%s5 + $0x10] sm:$0xf]
    %v350 = vld [vmem:[%s5 + $0x14] sm:$0xf]
    %v351 = vld [vmem:[%s5 + $0x18] sm:$0xf]
    %v352 = vld [vmem:[%s5 + $0x1c] sm:$0xf]
    %v353 = vld [vmem:[%s5 + $0x20] sm:$0xf]
    %v354 = vld [vmem:[%s5 + $0x24] sm:$0xf]
    %v355 = vld [vmem:[%s5 + $0x28] sm:$0xf]
    %v356 = vld [vmem:[%s5 + $0x2c] sm:$0xf]
    %v357 = vld [vmem:[%s5 + $0x30] sm:$0xf]
    %v358 = vld [vmem:[%s5 + $0x34] sm:$0xf]
    %v359 = vld [vmem:[%s5 + $0x38] sm:$0xf]
    %v360 = vld [vmem:[%s5 + $0x3c] sm:$0xf]
    %v361 = vld [vmem:[%s6] sm:$0x1]
    %v363 = vlaneseq
    %v364 = vshrl.u32 %v363, 7
    %v365 = vsub.s32 0, %v364
    %v366 = vrot.slane %v361, %v365
    %v384 = vunpack.c.l.b16 %v345
    %v385 = vunpack.c.l.b16 %v346
    %v386 = vunpack.c.l.b16 %v347
    %v387 = vunpack.c.l.b16 %v348
    %v388 = vunpack.c.l.b16 %v349
    %v389 = vunpack.c.l.b16 %v350
    %v390 = vunpack.c.l.b16 %v351
    %v391 = vunpack.c.l.b16 %v352
    %v392 = vunpack.c.l.b16 %v353
    %v393 = vunpack.c.l.b16 %v354
    %v394 = vunpack.c.l.b16 %v355
    %v395 = vunpack.c.l.b16 %v356
    %v396 = vunpack.c.l.b16 %v357
    %v397 = vunpack.c.l.b16 %v358
    %v398 = vunpack.c.l.b16 %v359
    %v399 = vunpack.c.l.b16 %v360
    %v400 = vpack.c.b16 %v385, %v384
    %v401 = vpack.c.b16 %v387, %v386
    %v402 = vpack.c.b16 %v389, %v388
    %v403 = vpack.c.b16 %v391, %v390
    %v404 = vpack.c.b16 %v393, %v392
    %v405 = vpack.c.b16 %v395, %v394
    %v406 = vpack.c.b16 %v397, %v396
    %v407 = vpack.c.b16 %v399, %v398
    %416 = vmatprep.subr.bf16.mxu0 0
    %417 = vmatpush1.bf16.msra.mxu0 %v400
    %418 = vmatprep.subr.bf16.mxu0 0
    %419 = vmatpush1.bf16.msra.mxu0 %v401
    %420 = vmatprep.subr.bf16.mxu0 0
    %421 = vmatpush1.bf16.msra.mxu0 %v402
    %422 = vmatprep.subr.bf16.mxu0 0
    %423 = vmatpush1.bf16.msra.mxu0 %v403
    %424 = vmatprep.subr.bf16.mxu0 0
    %425 = vmatpush1.bf16.msra.mxu0 %v404
    %426 = vmatprep.subr.bf16.mxu0 0
    %427 = vmatpush1.bf16.msra.mxu0 %v405
    %428 = vmatprep.subr.bf16.mxu0 0
    %429 = vmatpush1.bf16.msra.mxu0 %v406
    %430 = vmatprep.subr.bf16.mxu0 0
    %431 = vmatpush1.bf16.msra.mxu0 %v407
    %432 = vmatprep.subr.bf16.mxu0 0
    %433 = vmatpush1.bf16.msra.mxu0 0
    %434 = vmatprep.subr.bf16.mxu0 0
    %435 = vmatpush1.bf16.msra.mxu0 0
    %436 = vmatprep.subr.bf16.mxu0 0
    %437 = vmatpush1.bf16.msra.mxu0 0
    %438 = vmatprep.subr.bf16.mxu0 0
    %439 = vmatpush1.bf16.msra.mxu0 0
    %440 = vmatprep.subr.bf16.mxu0 0
    %441 = vmatpush1.bf16.msra.mxu0 0
    %442 = vmatprep.subr.bf16.mxu0 0
    %443 = vmatpush1.bf16.msra.mxu0 0
    %444 = vmatprep.subr.bf16.mxu0 0
    %445 = vmatpush1.bf16.msra.mxu0 0
    %446 = vmatprep.subr.bf16.mxu0 0
    %447 = vmatpush1.bf16.msra.mxu0 0
    %448 = vmatprep.mubr.bf16.mxu0 0
    %449 = vmatmul.mubr.bf16.gmra.mrb[0].mxu0 %v341
    %v450 = vpop.f32.mrb[0].mxu0
    %v451 = vadd.f32 %v366, %v450
    %v452 = vpop.f32.mrb[0].mxu0
    %v453 = vpop.f32.mrb[0].mxu0
    %v454 = vadd.f32 %v366, %v453
    %v455 = vpop.f32.mrb[0].mxu0
    %456 = vmatprep.mubr.bf16.mxu0 0
    %457 = vmatmul.mubr.bf16.gmra.mrb[0].mxu0 %v342
    %v458 = vpop.f32.mrb[0].mxu0
    %v459 = vadd.f32 %v366, %v458
    %v460 = vpop.f32.mrb[0].mxu0
    %v461 = vpop.f32.mrb[0].mxu0
    %v462 = vadd.f32 %v366, %v461
    %v463 = vpop.f32.mrb[0].mxu0
    %464 = vmatprep.mubr.bf16.mxu0 0
    %465 = vmatmul.mubr.bf16.gmra.mrb[0].mxu0 %v343
    %v466 = vpop.f32.mrb[0].mxu0
    %v467 = vadd.f32 %v366, %v466
    %v468 = vpop.f32.mrb[0].mxu0
    %v469 = vpop.f32.mrb[0].mxu0
    %v470 = vadd.f32 %v366, %v469
    %v471 = vpop.f32.mrb[0].mxu0
    %472 = vmatprep.mubr.bf16.mxu0 0
    %473 = vmatmul.mubr.bf16.gmra.mrb[0].mxu0 %v344
    %v474 = vpop.f32.mrb[0].mxu0
    %v475 = vadd.f32 %v366, %v474
    %v476 = vpop.f32.mrb[0].mxu0
    %v477 = vpop.f32.mrb[0].mxu0
    %v478 = vadd.f32 %v366, %v477
    %v479 = vpop.f32.mrb[0].mxu0
    %480 = vdwg.mxu0
    %v481 = vtanh.pop %v451
    %v482 = vtanh.pop %v454
    %v483 = vtanh.pop %v459
    %v484 = vtanh.pop %v462
    %v485 = vtanh.pop %v467
    %v486 = vtanh.pop %v470
    %v487 = vtanh.pop %v475
    %v488 = vtanh.pop %v478
    %v489 = vpack.c.bf16 %v482, %v481
    %v490 = vpack.c.bf16 %v484, %v483
    %v491 = vpack.c.bf16 %v486, %v485
    %v492 = vpack.c.bf16 %v488, %v487
    %v497 = vunpack.c.l.b16 %v489
    %v498 = vunpack.c.h.b16 %v489
    %v499 = vunpack.c.l.b16 %v490
    %v500 = vunpack.c.h.b16 %v490
    %v501 = vunpack.c.l.b16 %v491
    %v502 = vunpack.c.h.b16 %v491
    %v503 = vunpack.c.l.b16 %v492
    %v504 = vunpack.c.h.b16 %v492
    %v505 = vpack.c.b16 %v497, %v497
    %v506 = vpack.c.b16 %v498, %v498
    %v507 = vpack.c.b16 %v499, %v499
    %v508 = vpack.c.b16 %v500, %v500
    %v509 = vpack.c.b16 %v501, %v501
    %v510 = vpack.c.b16 %v502, %v502
    %v511 = vpack.c.b16 %v503, %v503
    %v512 = vpack.c.b16 %v504, %v504
    %521 = vst [vmem:[#allocation7] sm:$0xf] %v505
    %522 = vst [vmem:[#allocation7 + $0x4] sm:$0xf] %v506
    %523 = vst [vmem:[#allocation7 + $0x8] sm:$0xf] %v507
    %524 = vst [vmem:[#allocation7 + $0xc] sm:$0xf] %v508
    %525 = vst [vmem:[#allocation7 + $0x10] sm:$0xf] %v509
    %526 = vst [vmem:[#allocation7 + $0x14] sm:$0xf] %v510
    %527 = vst [vmem:[#allocation7 + $0x18] sm:$0xf] %v511
    %528 = vst [vmem:[#allocation7 + $0x1c] sm:$0xf] %v512
    // Predicated region
    $region38: #{tpu_custom_call.1} parent=1 // pred_check
      _
    $region39: #{tpu_custom_call.1} parent=1 // pred_check_branch
      %530 = sbr.rel (0) target = $region41
    $region40: #{tpu_custom_call.1} parent=1 // pred_region
      %s532 = ssub.s32 512, 512
      %533 = vsyncadd [#allocation4], %s532
      %s534 = sshll.u32 [#allocation7], 4
      %s535 = int_to_ptr.vmem [resolvable:$true] %s534
      %540 = dma.vmem_to_hbm [thread:$0]  %s535, 512, %s7, [#allocation4], 64, 64, 4
    $region41: #{tpu_custom_call.1} parent=1 // pred_fallthru
      _
    // Predicated region
    $region42: #{tpu_custom_call.1} parent=1 // pred_check
      _
    $region43: #{tpu_custom_call.1} parent=1 // pred_check_branch
      %542 = sbr.rel (0) target = $region45
    $region44: #{tpu_custom_call.1} parent=1 // pred_region
      %543 = dma.done [#allocation4], 512
    $region45: #{tpu_custom_call.1} parent=1 // pred_fallthru
      _
    %544 = vsyncpa [#allocation3], 1
    %545 = vsyncpa [#allocation6], 1
    %546 = vsyncpa [#allocation4], 1

</llo_original>
